<compile_context>
chip_gen: v7x
topology: tpu7x:2x2x1
jax: 0.10.0
libtpu: 0.0.40
codegen_flags: <defaults>
</compile_context>

<pallas_src>
import jax
import jax.numpy as jnp
from jax.experimental import pallas as pl
from jax.experimental.pallas import tpu as pltpu


def _round_up(x, m):
    return (x + m - 1) // m * m


def mlp_kernel(x_ref,
               w0_ref, b0_ref,
               w1_ref, b1_ref,
               w2_ref, b2_ref,
               w3_ref, b3_ref,
               w4_ref, b4_ref,
               o_ref):
    """One batch tile through all 5 layers. Weights/biases are VMEM-resident
    (constant index_map), so the only streamed operand is the x tile."""
    x = x_ref[...]  # (TM, D_in), bf16 (or f32)

    # Layer 0: bf16 x @ bf16 W0 on the MXU, f32 accumulate, f32 bias + ReLU.
    h = jnp.dot(x, w0_ref[...], preferred_element_type=jnp.float32) + b0_ref[...]
    h = jnp.maximum(h, 0.0)

    # Hidden layers: tiny (TM, hidden) intermediates, kept fully f32
    # (no bf16 elementwise -> safe/fast on v5e as well).
    h = jnp.dot(h, w1_ref[...], preferred_element_type=jnp.float32) + b1_ref[...]
    h = jnp.maximum(h, 0.0)
    h = jnp.dot(h, w2_ref[...], preferred_element_type=jnp.float32) + b2_ref[...]
    h = jnp.maximum(h, 0.0)
    h = jnp.dot(h, w3_ref[...], preferred_element_type=jnp.float32) + b3_ref[...]
    h = jnp.maximum(h, 0.0)

    # Final layer (no activation). Output columns are zero-padded to a
    # lane-dense width (multiple of 128) -> unmasked store.
    out = jnp.dot(h, w4_ref[...], preferred_element_type=jnp.float32) + b4_ref[...]
    o_ref[...] = out.astype(o_ref.dtype)


def mlp_forward(x, params, *, tm=512, use_bf16=True):
    """x: [B, C, H, W] float32. params: list of (W[in, out], b[1, out]) float32.
    Returns [B, out_dim] float32 matching the PyTorch MLP forward."""
    B = x.shape[0]
    x_flat = x.reshape(B, -1)               # torch x.view(B, -1) (row-major)
    d_in = x_flat.shape[1]
    hidden = params[0][0].shape[1]
    out_dim = params[-1][0].shape[1]

    # ---- batch tiling: sublane-aligned TM, never larger than needed --------
    tm = max(8, min(tm, _round_up(B, 8)))
    b_pad = _round_up(B, tm)
    if b_pad != B:
        x_flat = jnp.pad(x_flat, ((0, b_pad - B), (0, 0)))

    # ---- lane-dense output padding (zero columns, sliced off afterwards) ---
    n_pad = _round_up(out_dim, 128)

    # ---- dtype: bf16 stream for the dominant operand (x) and W0 ------------
    x_dtype = jnp.bfloat16 if use_bf16 else jnp.float32
    x_in = x_flat.astype(x_dtype)

    w0, b0 = params[0]
    w0 = w0.astype(x_dtype)
    w4, b4 = params[4]
    if n_pad != out_dim:
        w4 = jnp.pad(w4, ((0, 0), (0, n_pad - out_dim)))
        b4 = jnp.pad(b4, ((0, 0), (0, n_pad - out_dim)))
    kernel_params = [(w0, b0), params[1], params[2], params[3], (w4, b4)]

    # ---- specs --------------------------------------------------------------
    flat_args = [x_in]
    in_specs = [pl.BlockSpec((tm, d_in), lambda i: (i, 0))]       # streamed
    for w, b in kernel_params:
        flat_args += [w, b]
        in_specs += [pl.BlockSpec(w.shape, lambda i: (0, 0)),     # VMEM-resident
                     pl.BlockSpec(b.shape, lambda i: (0, 0))]
    out_spec = pl.BlockSpec((tm, n_pad), lambda i: (i, 0))
    grid = (b_pad // tm,)

    # ---- cost hint for XLA scheduling ---------------------------------------
    weight_bytes = sum(int(w.size) * w.dtype.itemsize + int(b.size) * b.dtype.itemsize
                       for w, b in kernel_params)
    flops = 2 * b_pad * (d_in * hidden + 3 * hidden * hidden + hidden * n_pad)
    bytes_accessed = (b_pad * d_in * jnp.dtype(x_dtype).itemsize
                      + b_pad * n_pad * 4
                      + weight_bytes)

    out_full = pl.pallas_call(
        mlp_kernel,
        out_shape=jax.ShapeDtypeStruct((b_pad, n_pad), jnp.float32),
        grid=grid,
        in_specs=in_specs,
        out_specs=out_spec,
        compiler_params=pltpu.CompilerParams(
            # batch axis is embarrassingly parallel -> megacore sharding on v7x,
            # harmless on single-TC v5e/v6e.
            dimension_semantics=("parallel",),
            # Headroom for TM up to ~2048 (bf16 x double-buffer + f32 out),
            # well within v7x's 64 MiB physical VMEM.
            vmem_limit_bytes=32 * 1024 * 1024,
        ),
        cost_estimate=pl.CostEstimate(flops=flops, transcendentals=0,
                                      bytes_accessed=bytes_accessed),
    )(*flat_args)

    return out_full[:B, :out_dim]


def init_linear(key, in_features, out_features):
    """Deterministic init mirroring torch.nn.Linear defaults (U(-k, k), k=1/sqrt(fan_in)).
    Weight stored as [in, out] (transposed vs. torch's [out, in])."""
    kw, kb = jax.random.split(key)
    bound = 1.0 / jnp.sqrt(jnp.float32(in_features))
    w = jax.random.uniform(kw, (in_features, out_features), jnp.float32,
                           minval=-bound, maxval=bound)
    b = jax.random.uniform(kb, (1, out_features), jnp.float32,
                           minval=-bound, maxval=bound)
    return w, b


def reference_forward(x, params, *, use_bf16=False):
    """Plain-JAX reference of the PyTorch forward. With use_bf16=True it applies
    the same layer-0 bf16 quantization as the kernel (for a tight math check)."""
    h = x.reshape(x.shape[0], -1)
    if use_bf16:
        h = h.astype(jnp.bfloat16)
    for i, (w, b) in enumerate(params):
        if i == 0 and use_bf16:
            w = w.astype(jnp.bfloat16)
        h = jnp.dot(h, w, preferred_element_type=jnp.float32) + b
        if i < len(params) - 1:
            h = jnp.maximum(h, 0.0)
    return h


if __name__ == "__main__":
    # Small shapes consistent with the module: image-like input, flattened.
    B, C, H, W = 2, 4, 16, 16
    input_dim = C * H * W   # 1024
    hidden = 32
    output = 8

    key = jax.random.PRNGKey(0)
    kx, k0, k1, k2, k3, k4 = jax.random.split(key, 6)

    x = jax.random.normal(kx, (B, C, H, W), jnp.float32)

    params = [
        init_linear(k0, input_dim, hidden),  # self.input
        init_linear(k1, hidden, hidden),     # self.layer1
        init_linear(k2, hidden, hidden),     # self.layer2
        init_linear(k3, hidden, hidden),     # self.layer3
        init_linear(k4, hidden, output),     # self.layer4
    ]

    out = mlp_forward(x, params)
    out = jax.block_until_ready(out)
    assert out.shape == (B, output), out.shape

    # 1) Kernel-math check: reference with identical bf16 layer-0 quantization.
    ref_bf16 = reference_forward(x, params, use_bf16=True)
    assert jnp.allclose(out, ref_bf16, atol=1e-4, rtol=1e-4), \
        "mismatch vs bf16-matched reference"

    # 2) Spec check: full-f32 PyTorch-equivalent forward (bf16-input tolerance).
    ref_f32 = reference_forward(x, params, use_bf16=False)
    assert jnp.allclose(out, ref_f32, atol=3e-2, rtol=3e-2), \
        "mismatch vs f32 reference"

    print("KERNEL_OK")
</pallas_src>

<mosaic_0001>
module attributes {stable_mosaic.version = 11 : i64} {
  func.func @mlp_kernel(%arg0: i32, %arg1: memref<8x1024xbf16, #tpu.memory_space<vmem>>, %arg2: memref<1024x32xbf16, #tpu.memory_space<vmem>>, %arg3: memref<1x32xf32, #tpu.memory_space<vmem>>, %arg4: memref<32x32xf32, #tpu.memory_space<vmem>>, %arg5: memref<1x32xf32, #tpu.memory_space<vmem>>, %arg6: memref<32x32xf32, #tpu.memory_space<vmem>>, %arg7: memref<1x32xf32, #tpu.memory_space<vmem>>, %arg8: memref<32x32xf32, #tpu.memory_space<vmem>>, %arg9: memref<1x32xf32, #tpu.memory_space<vmem>>, %arg10: memref<32x128xf32, #tpu.memory_space<vmem>>, %arg11: memref<1x128xf32, #tpu.memory_space<vmem>>, %arg12: memref<8x128xf32, #tpu.memory_space<vmem>>) attributes {dimension_semantics = [#tpu.dimension_semantics<parallel>], iteration_bounds = array<i64: 1>, scalar_prefetch = 0 : i64, scratch_operands = 0 : i64, tpu.core_type = #tpu.core_type<tc>, window_params = [{transform_indices = @transform_0, window_bounds = array<i64: 8, 1024>}, {pipeline_mode = #tpu.pipeline_mode<synchronous>, transform_indices = @transform_1, window_bounds = array<i64: 1024, 32>}, {pipeline_mode = #tpu.pipeline_mode<synchronous>, transform_indices = @transform_2, window_bounds = array<i64: 1, 32>}, {pipeline_mode = #tpu.pipeline_mode<synchronous>, transform_indices = @transform_3, window_bounds = array<i64: 32, 32>}, {pipeline_mode = #tpu.pipeline_mode<synchronous>, transform_indices = @transform_4, window_bounds = array<i64: 1, 32>}, {pipeline_mode = #tpu.pipeline_mode<synchronous>, transform_indices = @transform_5, window_bounds = array<i64: 32, 32>}, {pipeline_mode = #tpu.pipeline_mode<synchronous>, transform_indices = @transform_6, window_bounds = array<i64: 1, 32>}, {pipeline_mode = #tpu.pipeline_mode<synchronous>, transform_indices = @transform_7, window_bounds = array<i64: 32, 32>}, {pipeline_mode = #tpu.pipeline_mode<synchronous>, transform_indices = @transform_8, window_bounds = array<i64: 1, 32>}, {pipeline_mode = #tpu.pipeline_mode<synchronous>, transform_indices = @transform_9, window_bounds = array<i64: 32, 128>}, {pipeline_mode = #tpu.pipeline_mode<synchronous>, transform_indices = @transform_10, window_bounds = array<i64: 1, 128>}, {transform_indices = @transform_11, window_bounds = array<i64: 8, 128>}]} {
    %c0 = arith.constant 0 : index
    %c0_0 = arith.constant 0 : index
    %0 = vector.load %arg1[%c0, %c0_0] : memref<8x1024xbf16, #tpu.memory_space<vmem>>, vector<8x1024xbf16>
    %c0_1 = arith.constant 0 : index
    %c0_2 = arith.constant 0 : index
    %1 = vector.load %arg2[%c0_1, %c0_2] : memref<1024x32xbf16, #tpu.memory_space<vmem>>, vector<1024x32xbf16>
    %cst = arith.constant dense<0.000000e+00> : vector<8x32xf32>
    %2 = tpu.matmul %0, %1, %cst {dimension_numbers = #tpu.dot_dimension_numbers<[1], [0], [0], [1], [0, 0, 1, 1], [], []>} : vector<8x1024xbf16>, vector<1024x32xbf16>, vector<8x32xf32> -> vector<8x32xf32>
    %c0_3 = arith.constant 0 : index
    %c0_4 = arith.constant 0 : index
    %3 = vector.load %arg3[%c0_3, %c0_4] : memref<1x32xf32, #tpu.memory_space<vmem>>, vector<1x32xf32>
    %4 = vector.broadcast %3 : vector<1x32xf32> to vector<8x32xf32>
    %5 = arith.addf %2, %4 : vector<8x32xf32>
    %cst_5 = arith.constant 0.000000e+00 : f32
    %6 = vector.broadcast %cst_5 : f32 to vector<8x32xf32>
    %7 = arith.maximumf %5, %6 : vector<8x32xf32>
    %c0_6 = arith.constant 0 : index
    %c0_7 = arith.constant 0 : index
    %8 = vector.load %arg4[%c0_6, %c0_7] : memref<32x32xf32, #tpu.memory_space<vmem>>, vector<32x32xf32>
    %cst_8 = arith.constant dense<0.000000e+00> : vector<8x32xf32>
    %9 = tpu.matmul %7, %8, %cst_8 {dimension_numbers = #tpu.dot_dimension_numbers<[1], [0], [0], [1], [0, 0, 1, 1], [], []>} : vector<8x32xf32>, vector<32x32xf32>, vector<8x32xf32> -> vector<8x32xf32>
    %c0_9 = arith.constant 0 : index
    %c0_10 = arith.constant 0 : index
    %10 = vector.load %arg5[%c0_9, %c0_10] : memref<1x32xf32, #tpu.memory_space<vmem>>, vector<1x32xf32>
    %11 = vector.broadcast %10 : vector<1x32xf32> to vector<8x32xf32>
    %12 = arith.addf %9, %11 : vector<8x32xf32>
    %cst_11 = arith.constant 0.000000e+00 : f32
    %13 = vector.broadcast %cst_11 : f32 to vector<8x32xf32>
    %14 = arith.maximumf %12, %13 : vector<8x32xf32>
    %c0_12 = arith.constant 0 : index
    %c0_13 = arith.constant 0 : index
    %15 = vector.load %arg6[%c0_12, %c0_13] : memref<32x32xf32, #tpu.memory_space<vmem>>, vector<32x32xf32>
    %cst_14 = arith.constant dense<0.000000e+00> : vector<8x32xf32>
    %16 = tpu.matmul %14, %15, %cst_14 {dimension_numbers = #tpu.dot_dimension_numbers<[1], [0], [0], [1], [0, 0, 1, 1], [], []>} : vector<8x32xf32>, vector<32x32xf32>, vector<8x32xf32> -> vector<8x32xf32>
    %c0_15 = arith.constant 0 : index
    %c0_16 = arith.constant 0 : index
    %17 = vector.load %arg7[%c0_15, %c0_16] : memref<1x32xf32, #tpu.memory_space<vmem>>, vector<1x32xf32>
    %18 = vector.broadcast %17 : vector<1x32xf32> to vector<8x32xf32>
    %19 = arith.addf %16, %18 : vector<8x32xf32>
    %cst_17 = arith.constant 0.000000e+00 : f32
    %20 = vector.broadcast %cst_17 : f32 to vector<8x32xf32>
    %21 = arith.maximumf %19, %20 : vector<8x32xf32>
    %c0_18 = arith.constant 0 : index
    %c0_19 = arith.constant 0 : index
    %22 = vector.load %arg8[%c0_18, %c0_19] : memref<32x32xf32, #tpu.memory_space<vmem>>, vector<32x32xf32>
    %cst_20 = arith.constant dense<0.000000e+00> : vector<8x32xf32>
    %23 = tpu.matmul %21, %22, %cst_20 {dimension_numbers = #tpu.dot_dimension_numbers<[1], [0], [0], [1], [0, 0, 1, 1], [], []>} : vector<8x32xf32>, vector<32x32xf32>, vector<8x32xf32> -> vector<8x32xf32>
    %c0_21 = arith.constant 0 : index
    %c0_22 = arith.constant 0 : index
    %24 = vector.load %arg9[%c0_21, %c0_22] : memref<1x32xf32, #tpu.memory_space<vmem>>, vector<1x32xf32>
    %25 = vector.broadcast %24 : vector<1x32xf32> to vector<8x32xf32>
    %26 = arith.addf %23, %25 : vector<8x32xf32>
    %cst_23 = arith.constant 0.000000e+00 : f32
    %27 = vector.broadcast %cst_23 : f32 to vector<8x32xf32>
    %28 = arith.maximumf %26, %27 : vector<8x32xf32>
    %c0_24 = arith.constant 0 : index
    %c0_25 = arith.constant 0 : index
    %29 = vector.load %arg10[%c0_24, %c0_25] : memref<32x128xf32, #tpu.memory_space<vmem>>, vector<32x128xf32>
    %cst_26 = arith.constant dense<0.000000e+00> : vector<8x128xf32>
    %30 = tpu.matmul %28, %29, %cst_26 {dimension_numbers = #tpu.dot_dimension_numbers<[1], [0], [0], [1], [0, 0, 1, 1], [], []>} : vector<8x32xf32>, vector<32x128xf32>, vector<8x128xf32> -> vector<8x128xf32>
    %c0_27 = arith.constant 0 : index
    %c0_28 = arith.constant 0 : index
    %31 = vector.load %arg11[%c0_27, %c0_28] : memref<1x128xf32, #tpu.memory_space<vmem>>, vector<1x128xf32>
    %32 = vector.broadcast %31 : vector<1x128xf32> to vector<8x128xf32>
    %33 = arith.addf %30, %32 : vector<8x128xf32>
    %c0_29 = arith.constant 0 : index
    %c0_30 = arith.constant 0 : index
    %34 = vector.load %arg12[%c0_29, %c0_30] : memref<8x128xf32, #tpu.memory_space<vmem>>, vector<8x128xf32>
    tpu.vector_store %arg12[%c0_29, %c0_30], %33 {strides = array<i32>} : memref<8x128xf32, #tpu.memory_space<vmem>>, vector<8x128xf32>,
    return
  }
  func.func @transform_0(%arg0: i32) -> (i32, i32) {
    %c0_i32 = arith.constant 0 : i32
    %c0_i32_0 = arith.constant 0 : i32
    return %arg0, %c0_i32 : i32, i32
  }
  func.func @transform_1(%arg0: i32) -> (i32, i32) {
    %c0_i32 = arith.constant 0 : i32
    %c0_i32_0 = arith.constant 0 : i32
    %c0_i32_1 = arith.constant 0 : i32
    return %c0_i32, %c0_i32_0 : i32, i32
  }
  func.func @transform_2(%arg0: i32) -> (i32, i32) {
    %c0_i32 = arith.constant 0 : i32
    %c0_i32_0 = arith.constant 0 : i32
    %c0_i32_1 = arith.constant 0 : i32
    return %c0_i32, %c0_i32_0 : i32, i32
  }
  func.func @transform_3(%arg0: i32) -> (i32, i32) {
    %c0_i32 = arith.constant 0 : i32
    %c0_i32_0 = arith.constant 0 : i32
    %c0_i32_1 = arith.constant 0 : i32
    return %c0_i32, %c0_i32_0 : i32, i32
  }
  func.func @transform_4(%arg0: i32) -> (i32, i32) {
    %c0_i32 = arith.constant 0 : i32
    %c0_i32_0 = arith.constant 0 : i32
    %c0_i32_1 = arith.constant 0 : i32
    return %c0_i32, %c0_i32_0 : i32, i32
  }
  func.func @transform_5(%arg0: i32) -> (i32, i32) {
    %c0_i32 = arith.constant 0 : i32
    %c0_i32_0 = arith.constant 0 : i32
    %c0_i32_1 = arith.constant 0 : i32
    return %c0_i32, %c0_i32_0 : i32, i32
  }
  func.func @transform_6(%arg0: i32) -> (i32, i32) {
    %c0_i32 = arith.constant 0 : i32
    %c0_i32_0 = arith.constant 0 : i32
    %c0_i32_1 = arith.constant 0 : i32
    return %c0_i32, %c0_i32_0 : i32, i32
  }
  func.func @transform_7(%arg0: i32) -> (i32, i32) {
    %c0_i32 = arith.constant 0 : i32
    %c0_i32_0 = arith.constant 0 : i32
    %c0_i32_1 = arith.constant 0 : i32
    return %c0_i32, %c0_i32_0 : i32, i32
  }
  func.func @transform_8(%arg0: i32) -> (i32, i32) {
    %c0_i32 = arith.constant 0 : i32
    %c0_i32_0 = arith.constant 0 : i32
    %c0_i32_1 = arith.constant 0 : i32
    return %c0_i32, %c0_i32_0 : i32, i32
  }
  func.func @transform_9(%arg0: i32) -> (i32, i32) {
    %c0_i32 = arith.constant 0 : i32
    %c0_i32_0 = arith.constant 0 : i32
    %c0_i32_1 = arith.constant 0 : i32
    return %c0_i32, %c0_i32_0 : i32, i32
  }
  func.func @transform_10(%arg0: i32) -> (i32, i32) {
    %c0_i32 = arith.constant 0 : i32
    %c0_i32_0 = arith.constant 0 : i32
    %c0_i32_1 = arith.constant 0 : i32
    return %c0_i32, %c0_i32_0 : i32, i32
  }
  func.func @transform_11(%arg0: i32) -> (i32, i32) {
    %c0_i32 = arith.constant 0 : i32
    %c0_i32_0 = arith.constant 0 : i32
    return %arg0, %c0_i32 : i32, i32
  }
}

</mosaic_0001>

<llo_original>
// kernel: tpu_custom_call.1
$region0: #{tpu_custom_call.1}
  #allocation0 [shape = 'u32[]', space=smem, size = 0x4, offset = 0x4, fixed_abs, tag = 'smem constant byte address 0x4 - core index']
  #allocation1 [shape = 'u32[144,128]{1,0:T(1,128)}', space=vmem, size = 0x12000, scoped, tag = 'internal scratch']
  %s0 = inlined_call_operand.vmem [shape: bf16[8,1024], index: 0, kind: input, shape index: {}]
  %s1 = inlined_call_operand.vmem [shape: bf16[1024,32], index: 1, kind: input, shape index: {}]
  %s2 = inlined_call_operand.vmem [shape: f32[1,32], index: 2, kind: input, shape index: {}]
  %s3 = inlined_call_operand.vmem [shape: f32[32,32], index: 3, kind: input, shape index: {}]
  %s4 = inlined_call_operand.vmem [shape: f32[1,32], index: 4, kind: input, shape index: {}]
  %s5 = inlined_call_operand.vmem [shape: f32[32,32], index: 5, kind: input, shape index: {}]
  %s6 = inlined_call_operand.vmem [shape: f32[1,32], index: 6, kind: input, shape index: {}]
  %s7 = inlined_call_operand.vmem [shape: f32[32,32], index: 7, kind: input, shape index: {}]
  %s8 = inlined_call_operand.vmem [shape: f32[1,32], index: 8, kind: input, shape index: {}]
  %s9 = inlined_call_operand.vmem [shape: f32[32,128], index: 9, kind: input, shape index: {}]
  %s10 = inlined_call_operand.vmem [shape: f32[1,128], index: 10, kind: input, shape index: {}]
  %s11 = inlined_call_operand.hbm [shape: f32[8,128], index: 11, kind: output, shape index: {}]
  %s12 = sld [smem:[#allocation0]]
  $region54: #{tpu_custom_call.1} parent=0
    _
  %s14 = ssub.s32 1, %s12
  %s15 = scalar_select 0, %s14, %s12
  $region1: #{tpu_custom_call.1} parent=0
    #allocation2 [shape = 'u8[4096]{0}', space=vmem, size = 0x1000, scoped, tag = 'output window, operand 0, single buffered']
    #allocation3 [shape = 's32[1]{0}', space=sflag, size = 0x4, scoped, tag = 'scoped memory for tpu_custom_call.1']
    %16 = vsyncpa [#allocation3], 0
    // Predicated region
    $region2: #{tpu_custom_call.1} parent=1 // pred_check
      _
    $region3: #{tpu_custom_call.1} parent=1 // pred_check_branch
      %18 = sbr.rel (0) target = $region5
    $region4: #{tpu_custom_call.1} parent=1 // pred_region
      _
    $region5: #{tpu_custom_call.1} parent=1 // pred_fallthru
      _
    // Predicated region
    $region6: #{tpu_custom_call.1} parent=1 // pred_check
      _
    $region7: #{tpu_custom_call.1} parent=1 // pred_check_branch
      %20 = sbr.rel (0) target = $region9
    $region8: #{tpu_custom_call.1} parent=1 // pred_region
      _
    $region9: #{tpu_custom_call.1} parent=1 // pred_fallthru
      _
    // Predicated region
    $region10: #{tpu_custom_call.1} parent=1 // pred_check
      _
    $region11: #{tpu_custom_call.1} parent=1 // pred_check_branch
      %22 = sbr.rel (0) target = $region13
    $region12: #{tpu_custom_call.1} parent=1 // pred_region
      _
    $region13: #{tpu_custom_call.1} parent=1 // pred_fallthru
      _
    // Predicated region
    $region14: #{tpu_custom_call.1} parent=1 // pred_check
      _
    $region15: #{tpu_custom_call.1} parent=1 // pred_check_branch
      %24 = sbr.rel (0) target = $region17
    $region16: #{tpu_custom_call.1} parent=1 // pred_region
      _
    $region17: #{tpu_custom_call.1} parent=1 // pred_fallthru
      _
    // Predicated region
    $region18: #{tpu_custom_call.1} parent=1 // pred_check
      _
    $region19: #{tpu_custom_call.1} parent=1 // pred_check_branch
      %26 = sbr.rel (0) target = $region21
    $region20: #{tpu_custom_call.1} parent=1 // pred_region
      _
    $region21: #{tpu_custom_call.1} parent=1 // pred_fallthru
      _
    // Predicated region
    $region22: #{tpu_custom_call.1} parent=1 // pred_check
      _
    $region23: #{tpu_custom_call.1} parent=1 // pred_check_branch
      %28 = sbr.rel (0) target = $region25
    $region24: #{tpu_custom_call.1} parent=1 // pred_region
      _
    $region25: #{tpu_custom_call.1} parent=1 // pred_fallthru
      _
    // Predicated region
    $region26: #{tpu_custom_call.1} parent=1 // pred_check
      _
    $region27: #{tpu_custom_call.1} parent=1 // pred_check_branch
      %30 = sbr.rel (0) target = $region29
    $region28: #{tpu_custom_call.1} parent=1 // pred_region
      _
    $region29: #{tpu_custom_call.1} parent=1 // pred_fallthru
      _
    // Predicated region
    $region30: #{tpu_custom_call.1} parent=1 // pred_check
      _
    $region31: #{tpu_custom_call.1} parent=1 // pred_check_branch
      %32 = sbr.rel (0) target = $region33
    $region32: #{tpu_custom_call.1} parent=1 // pred_region
      _
    $region33: #{tpu_custom_call.1} parent=1 // pred_fallthru
      _
    // Predicated region
    $region34: #{tpu_custom_call.1} parent=1 // pred_check
      _
    $region35: #{tpu_custom_call.1} parent=1 // pred_check_branch
      %34 = sbr.rel (0) target = $region37
    $region36: #{tpu_custom_call.1} parent=1 // pred_region
      _
    $region37: #{tpu_custom_call.1} parent=1 // pred_fallthru
      _
    // Predicated region
    $region38: #{tpu_custom_call.1} parent=1 // pred_check
      _
    $region39: #{tpu_custom_call.1} parent=1 // pred_check_branch
      %36 = sbr.rel (0) target = $region41
    $region40: #{tpu_custom_call.1} parent=1 // pred_region
      _
    $region41: #{tpu_custom_call.1} parent=1 // pred_fallthru
      _
    // Predicated region
    $region42: #{tpu_custom_call.1} parent=1 // pred_check
      _
    $region43: #{tpu_custom_call.1} parent=1 // pred_check_branch
      %38 = sbr.rel (0) target = $region45
    $region44: #{tpu_custom_call.1} parent=1 // pred_region
      _
    $region45: #{tpu_custom_call.1} parent=1 // pred_fallthru
      _
    %v40 = vld [vmem:[%s0] sm:$0xff]
    %v41 = vld [vmem:[%s0 + $0x8] sm:$0xff]
    %v42 = vld [vmem:[%s0 + $0x10] sm:$0xff]
    %v43 = vld [vmem:[%s0 + $0x18] sm:$0xff]
    %v44 = vld [vmem:[%s1] sm:$0xf]
    %v45 = vld [vmem:[%s1 + $0x4] sm:$0xf]
    %v46 = vld [vmem:[%s1 + $0x8] sm:$0xf]
    %v47 = vld [vmem:[%s1 + $0xc] sm:$0xf]
    %v48 = vld [vmem:[%s1 + $0x10] sm:$0xf]
    %v49 = vld [vmem:[%s1 + $0x14] sm:$0xf]
    %v50 = vld [vmem:[%s1 + $0x18] sm:$0xf]
    %v51 = vld [vmem:[%s1 + $0x1c] sm:$0xf]
    %v52 = vld [vmem:[%s1 + $0x20] sm:$0xf]
    %v53 = vld [vmem:[%s1 + $0x24] sm:$0xf]
    %v54 = vld [vmem:[%s1 + $0x28] sm:$0xf]
    %v55 = vld [vmem:[%s1 + $0x2c] sm:$0xf]
    %v56 = vld [vmem:[%s1 + $0x30] sm:$0xf]
    %v57 = vld [vmem:[%s1 + $0x34] sm:$0xf]
    %v58 = vld [vmem:[%s1 + $0x38] sm:$0xf]
    %v59 = vld [vmem:[%s1 + $0x3c] sm:$0xf]
    %v60 = vld [vmem:[%s1 + $0x40] sm:$0xf]
    %v61 = vld [vmem:[%s1 + $0x44] sm:$0xf]
    %v62 = vld [vmem:[%s1 + $0x48] sm:$0xf]
    %v63 = vld [vmem:[%s1 + $0x4c] sm:$0xf]
    %v64 = vld [vmem:[%s1 + $0x50] sm:$0xf]
    %v65 = vld [vmem:[%s1 + $0x54] sm:$0xf]
    %v66 = vld [vmem:[%s1 + $0x58] sm:$0xf]
    %v67 = vld [vmem:[%s1 + $0x5c] sm:$0xf]
    %v68 = vld [vmem:[%s1 + $0x60] sm:$0xf]
    %v69 = vld [vmem:[%s1 + $0x64] sm:$0xf]
    %v70 = vld [vmem:[%s1 + $0x68] sm:$0xf]
    %v71 = vld [vmem:[%s1 + $0x6c] sm:$0xf]
    %v72 = vld [vmem:[%s1 + $0x70] sm:$0xf]
    %v73 = vld [vmem:[%s1 + $0x74] sm:$0xf]
    %v74 = vld [vmem:[%s1 + $0x78] sm:$0xf]
    %v75 = vld [vmem:[%s1 + $0x7c] sm:$0xf]
    %v76 = vld [vmem:[%s1 + $0x80] sm:$0xf]
    %v77 = vld [vmem:[%s1 + $0x84] sm:$0xf]
    %v78 = vld [vmem:[%s1 + $0x88] sm:$0xf]
    %v79 = vld [vmem:[%s1 + $0x8c] sm:$0xf]
    %v80 = vld [vmem:[%s1 + $0x90] sm:$0xf]
    %v81 = vld [vmem:[%s1 + $0x94] sm:$0xf]
    %v82 = vld [vmem:[%s1 + $0x98] sm:$0xf]
    %v83 = vld [vmem:[%s1 + $0x9c] sm:$0xf]
    %v84 = vld [vmem:[%s1 + $0xa0] sm:$0xf]
    %v85 = vld [vmem:[%s1 + $0xa4] sm:$0xf]
    %v86 = vld [vmem:[%s1 + $0xa8] sm:$0xf]
    %v87 = vld [vmem:[%s1 + $0xac] sm:$0xf]
    %v88 = vld [vmem:[%s1 + $0xb0] sm:$0xf]
    %v89 = vld [vmem:[%s1 + $0xb4] sm:$0xf]
    %v90 = vld [vmem:[%s1 + $0xb8] sm:$0xf]
    %v91 = vld [vmem:[%s1 + $0xbc] sm:$0xf]
    %v92 = vld [vmem:[%s1 + $0xc0] sm:$0xf]
    %v93 = vld [vmem:[%s1 + $0xc4] sm:$0xf]
    %v94 = vld [vmem:[%s1 + $0xc8] sm:$0xf]
    %v95 = vld [vmem:[%s1 + $0xcc] sm:$0xf]
    %v96 = vld [vmem:[%s1 + $0xd0] sm:$0xf]
    %v97 = vld [vmem:[%s1 + $0xd4] sm:$0xf]
    %v98 = vld [vmem:[%s1 + $0xd8] sm:$0xf]
    %v99 = vld [vmem:[%s1 + $0xdc] sm:$0xf]
    %v100 = vld [vmem:[%s1 + $0xe0] sm:$0xf]
    %v101 = vld [vmem:[%s1 + $0xe4] sm:$0xf]
    %v102 = vld [vmem:[%s1 + $0xe8] sm:$0xf]
    %v103 = vld [vmem:[%s1 + $0xec] sm:$0xf]
    %v104 = vld [vmem:[%s1 + $0xf0] sm:$0xf]
    %v105 = vld [vmem:[%s1 + $0xf4] sm:$0xf]
    %v106 = vld [vmem:[%s1 + $0xf8] sm:$0xf]
    %v107 = vld [vmem:[%s1 + $0xfc] sm:$0xf]
    %v108 = vld [vmem:[%s1 + $0x100] sm:$0xf]
    %v109 = vld [vmem:[%s1 + $0x104] sm:$0xf]
    %v110 = vld [vmem:[%s1 + $0x108] sm:$0xf]
    %v111 = vld [vmem:[%s1 + $0x10c] sm:$0xf]
    %v112 = vld [vmem:[%s1 + $0x110] sm:$0xf]
    %v113 = vld [vmem:[%s1 + $0x114] sm:$0xf]
    %v114 = vld [vmem:[%s1 + $0x118] sm:$0xf]
    %v115 = vld [vmem:[%s1 + $0x11c] sm:$0xf]
    %v116 = vld [vmem:[%s1 + $0x120] sm:$0xf]
    %v117 = vld [vmem:[%s1 + $0x124] sm:$0xf]
    %v118 = vld [vmem:[%s1 + $0x128] sm:$0xf]
    %v119 = vld [vmem:[%s1 + $0x12c] sm:$0xf]
    %v120 = vld [vmem:[%s1 + $0x130] sm:$0xf]
    %v121 = vld [vmem:[%s1 + $0x134] sm:$0xf]
    %v122 = vld [vmem:[%s1 + $0x138] sm:$0xf]
    %v123 = vld [vmem:[%s1 + $0x13c] sm:$0xf]
    %v124 = vld [vmem:[%s1 + $0x140] sm:$0xf]
    %v125 = vld [vmem:[%s1 + $0x144] sm:$0xf]
    %v126 = vld [vmem:[%s1 + $0x148] sm:$0xf]
    %v127 = vld [vmem:[%s1 + $0x14c] sm:$0xf]
    %v128 = vld [vmem:[%s1 + $0x150] sm:$0xf]
    %v129 = vld [vmem:[%s1 + $0x154] sm:$0xf]
    %v130 = vld [vmem:[%s1 + $0x158] sm:$0xf]
    %v131 = vld [vmem:[%s1 + $0x15c] sm:$0xf]
    %v132 = vld [vmem:[%s1 + $0x160] sm:$0xf]
    %v133 = vld [vmem:[%s1 + $0x164] sm:$0xf]
    %v134 = vld [vmem:[%s1 + $0x168] sm:$0xf]
    %v135 = vld [vmem:[%s1 + $0x16c] sm:$0xf]
    %v136 = vld [vmem:[%s1 + $0x170] sm:$0xf]
    %v137 = vld [vmem:[%s1 + $0x174] sm:$0xf]
    %v138 = vld [vmem:[%s1 + $0x178] sm:$0xf]
    %v139 = vld [vmem:[%s1 + $0x17c] sm:$0xf]
    %v140 = vld [vmem:[%s1 + $0x180] sm:$0xf]
    %v141 = vld [vmem:[%s1 + $0x184] sm:$0xf]
    %v142 = vld [vmem:[%s1 + $0x188] sm:$0xf]
    %v143 = vld [vmem:[%s1 + $0x18c] sm:$0xf]
    %v144 = vld [vmem:[%s1 + $0x190] sm:$0xf]
    %v145 = vld [vmem:[%s1 + $0x194] sm:$0xf]
    %v146 = vld [vmem:[%s1 + $0x198] sm:$0xf]
    %v147 = vld [vmem:[%s1 + $0x19c] sm:$0xf]
    %v148 = vld [vmem:[%s1 + $0x1a0] sm:$0xf]
    %v149 = vld [vmem:[%s1 + $0x1a4] sm:$0xf]
    %v150 = vld [vmem:[%s1 + $0x1a8] sm:$0xf]
    %v151 = vld [vmem:[%s1 + $0x1ac] sm:$0xf]
    %v152 = vld [vmem:[%s1 + $0x1b0] sm:$0xf]
    %v153 = vld [vmem:[%s1 + $0x1b4] sm:$0xf]
    %v154 = vld [vmem:[%s1 + $0x1b8] sm:$0xf]
    %v155 = vld [vmem:[%s1 + $0x1bc] sm:$0xf]
    %v156 = vld [vmem:[%s1 + $0x1c0] sm:$0xf]
    %v157 = vld [vmem:[%s1 + $0x1c4] sm:$0xf]
    %v158 = vld [vmem:[%s1 + $0x1c8] sm:$0xf]
    %v159 = vld [vmem:[%s1 + $0x1cc] sm:$0xf]
    %v160 = vld [vmem:[%s1 + $0x1d0] sm:$0xf]
    %v161 = vld [vmem:[%s1 + $0x1d4] sm:$0xf]
    %v162 = vld [vmem:[%s1 + $0x1d8] sm:$0xf]
    %v163 = vld [vmem:[%s1 + $0x1dc] sm:$0xf]
    %v164 = vld [vmem:[%s1 + $0x1e0] sm:$0xf]
    %v165 = vld [vmem:[%s1 + $0x1e4] sm:$0xf]
    %v166 = vld [vmem:[%s1 + $0x1e8] sm:$0xf]
    %v167 = vld [vmem:[%s1 + $0x1ec] sm:$0xf]
    %v168 = vld [vmem:[%s1 + $0x1f0] sm:$0xf]
    %v169 = vld [vmem:[%s1 + $0x1f4] sm:$0xf]
    %v170 = vld [vmem:[%s1 + $0x1f8] sm:$0xf]
    %v171 = vld [vmem:[%s1 + $0x1fc] sm:$0xf]
    %v172 = vld [vmem:[%s2] sm:$0x1]
    %v174 = vlaneseq
    %v175 = vshrl.u32 %v174, 7
    %v176 = vsub.s32 0, %v175
    %v177 = vrot.slane %v172, %v176
    %v183 = vunpack.c.l.b16 %v40
    %v184 = vunpack.c.h.b16 %v40
    %v185 = vunpack.c.l.b16 %v41
    %v186 = vunpack.c.h.b16 %v41
    %v187 = vunpack.c.l.b16 %v42
    %v188 = vunpack.c.h.b16 %v42
    %v189 = vunpack.c.l.b16 %v43
    %v190 = vunpack.c.h.b16 %v43
    %v191 = vpack.c.b16 %v183, %v183
    %v192 = vpack.c.b16 %v184, %v184
    %v193 = vpack.c.b16 %v185, %v185
    %v194 = vpack.c.b16 %v186, %v186
    %v195 = vpack.c.b16 %v187, %v187
    %v196 = vpack.c.b16 %v188, %v188
    %v197 = vpack.c.b16 %v189, %v189
    %v198 = vpack.c.b16 %v190, %v190
    %v335 = vunpack.c.l.b16 %v44
    %v336 = vunpack.c.l.b16 %v45
    %v337 = vunpack.c.l.b16 %v46
    %v338 = vunpack.c.l.b16 %v47
    %v339 = vunpack.c.l.b16 %v48
    %v340 = vunpack.c.l.b16 %v49
    %v341 = vunpack.c.l.b16 %v50
    %v342 = vunpack.c.l.b16 %v51
    %v343 = vunpack.c.l.b16 %v52
    %v344 = vunpack.c.l.b16 %v53
    %v345 = vunpack.c.l.b16 %v54
    %v346 = vunpack.c.l.b16 %v55
    %v347 = vunpack.c.l.b16 %v56
    %v348 = vunpack.c.l.b16 %v57
    %v349 = vunpack.c.l.b16 %v58
    %v350 = vunpack.c.l.b16 %v59
    %v351 = vunpack.c.l.b16 %v60
    %v352 = vunpack.c.l.b16 %v61
    %v353 = vunpack.c.l.b16 %v62
    %v354 = vunpack.c.l.b16 %v63
    %v355 = vunpack.c.l.b16 %v64
    %v356 = vunpack.c.l.b16 %v65
    %v357 = vunpack.c.l.b16 %v66
    %v358 = vunpack.c.l.b16 %v67
    %v359 = vunpack.c.l.b16 %v68
    %v360 = vunpack.c.l.b16 %v69
    %v361 = vunpack.c.l.b16 %v70
    %v362 = vunpack.c.l.b16 %v71
    %v363 = vunpack.c.l.b16 %v72
    %v364 = vunpack.c.l.b16 %v73
    %v365 = vunpack.c.l.b16 %v74
    %v366 = vunpack.c.l.b16 %v75
    %v367 = vunpack.c.l.b16 %v76
    %v368 = vunpack.c.l.b16 %v77
    %v369 = vunpack.c.l.b16 %v78
    %v370 = vunpack.c.l.b16 %v79
    %v371 = vunpack.c.l.b16 %v80
    %v372 = vunpack.c.l.b16 %v81
    %v373 = vunpack.c.l.b16 %v82
    %v374 = vunpack.c.l.b16 %v83
    %v375 = vunpack.c.l.b16 %v84
    %v376 = vunpack.c.l.b16 %v85
    %v377 = vunpack.c.l.b16 %v86
    %v378 = vunpack.c.l.b16 %v87
    %v379 = vunpack.c.l.b16 %v88
    %v380 = vunpack.c.l.b16 %v89
    %v381 = vunpack.c.l.b16 %v90
    %v382 = vunpack.c.l.b16 %v91
    %v383 = vunpack.c.l.b16 %v92
    %v384 = vunpack.c.l.b16 %v93
    %v385 = vunpack.c.l.b16 %v94
    %v386 = vunpack.c.l.b16 %v95
    %v387 = vunpack.c.l.b16 %v96
    %v388 = vunpack.c.l.b16 %v97
    %v389 = vunpack.c.l.b16 %v98
    %v390 = vunpack.c.l.b16 %v99
    %v391 = vunpack.c.l.b16 %v100
    %v392 = vunpack.c.l.b16 %v101
    %v393 = vunpack.c.l.b16 %v102
    %v394 = vunpack.c.l.b16 %v103
    %v395 = vunpack.c.l.b16 %v104
    %v396 = vunpack.c.l.b16 %v105
    %v397 = vunpack.c.l.b16 %v106
    %v398 = vunpack.c.l.b16 %v107
    %v399 = vunpack.c.l.b16 %v108
    %v400 = vunpack.c.l.b16 %v109
    %v401 = vunpack.c.l.b16 %v110
    %v402 = vunpack.c.l.b16 %v111
    %v403 = vunpack.c.l.b16 %v112
    %v404 = vunpack.c.l.b16 %v113
    %v405 = vunpack.c.l.b16 %v114
    %v406 = vunpack.c.l.b16 %v115
    %v407 = vunpack.c.l.b16 %v116
    %v408 = vunpack.c.l.b16 %v117
    %v409 = vunpack.c.l.b16 %v118
    %v410 = vunpack.c.l.b16 %v119
    %v411 = vunpack.c.l.b16 %v120
    %v412 = vunpack.c.l.b16 %v121
    %v413 = vunpack.c.l.b16 %v122
    %v414 = vunpack.c.l.b16 %v123
    %v415 = vunpack.c.l.b16 %v124
    %v416 = vunpack.c.l.b16 %v125
    %v417 = vunpack.c.l.b16 %v126
    %v418 = vunpack.c.l.b16 %v127
    %v419 = vunpack.c.l.b16 %v128
    %v420 = vunpack.c.l.b16 %v129
    %v421 = vunpack.c.l.b16 %v130
    %v422 = vunpack.c.l.b16 %v131
    %v423 = vunpack.c.l.b16 %v132
    %v424 = vunpack.c.l.b16 %v133
    %v425 = vunpack.c.l.b16 %v134
    %v426 = vunpack.c.l.b16 %v135
    %v427 = vunpack.c.l.b16 %v136
    %v428 = vunpack.c.l.b16 %v137
    %v429 = vunpack.c.l.b16 %v138
    %v430 = vunpack.c.l.b16 %v139
    %v431 = vunpack.c.l.b16 %v140
    %v432 = vunpack.c.l.b16 %v141
    %v433 = vunpack.c.l.b16 %v142
    %v434 = vunpack.c.l.b16 %v143
    %v435 = vunpack.c.l.b16 %v144
    %v436 = vunpack.c.l.b16 %v145
    %v437 = vunpack.c.l.b16 %v146
    %v438 = vunpack.c.l.b16 %v147
    %v439 = vunpack.c.l.b16 %v148
    %v440 = vunpack.c.l.b16 %v149
    %v441 = vunpack.c.l.b16 %v150
    %v442 = vunpack.c.l.b16 %v151
    %v443 = vunpack.c.l.b16 %v152
    %v444 = vunpack.c.l.b16 %v153
    %v445 = vunpack.c.l.b16 %v154
    %v446 = vunpack.c.l.b16 %v155
    %v447 = vunpack.c.l.b16 %v156
    %v448 = vunpack.c.l.b16 %v157
    %v449 = vunpack.c.l.b16 %v158
    %v450 = vunpack.c.l.b16 %v159
    %v451 = vunpack.c.l.b16 %v160
    %v452 = vunpack.c.l.b16 %v161
    %v453 = vunpack.c.l.b16 %v162
    %v454 = vunpack.c.l.b16 %v163
    %v455 = vunpack.c.l.b16 %v164
    %v456 = vunpack.c.l.b16 %v165
    %v457 = vunpack.c.l.b16 %v166
    %v458 = vunpack.c.l.b16 %v167
    %v459 = vunpack.c.l.b16 %v168
    %v460 = vunpack.c.l.b16 %v169
    %v461 = vunpack.c.l.b16 %v170
    %v462 = vunpack.c.l.b16 %v171
    %v463 = vpack.c.b16 %v336, %v335
    %v464 = vpack.c.b16 %v338, %v337
    %v465 = vpack.c.b16 %v340, %v339
    %v466 = vpack.c.b16 %v342, %v341
    %v467 = vpack.c.b16 %v344, %v343
    %v468 = vpack.c.b16 %v346, %v345
    %v469 = vpack.c.b16 %v348, %v347
    %v470 = vpack.c.b16 %v350, %v349
    %v471 = vpack.c.b16 %v352, %v351
    %v472 = vpack.c.b16 %v354, %v353
    %v473 = vpack.c.b16 %v356, %v355
    %v474 = vpack.c.b16 %v358, %v357
    %v475 = vpack.c.b16 %v360, %v359
    %v476 = vpack.c.b16 %v362, %v361
    %v477 = vpack.c.b16 %v364, %v363
    %v478 = vpack.c.b16 %v366, %v365
    %v479 = vpack.c.b16 %v368, %v367
    %v480 = vpack.c.b16 %v370, %v369
    %v481 = vpack.c.b16 %v372, %v371
    %v482 = vpack.c.b16 %v374, %v373
    %v483 = vpack.c.b16 %v376, %v375
    %v484 = vpack.c.b16 %v378, %v377
    %v485 = vpack.c.b16 %v380, %v379
    %v486 = vpack.c.b16 %v382, %v381
    %v487 = vpack.c.b16 %v384, %v383
    %v488 = vpack.c.b16 %v386, %v385
    %v489 = vpack.c.b16 %v388, %v387
    %v490 = vpack.c.b16 %v390, %v389
    %v491 = vpack.c.b16 %v392, %v391
    %v492 = vpack.c.b16 %v394, %v393
    %v493 = vpack.c.b16 %v396, %v395
    %v494 = vpack.c.b16 %v398, %v397
    %v495 = vpack.c.b16 %v400, %v399
    %v496 = vpack.c.b16 %v402, %v401
    %v497 = vpack.c.b16 %v404, %v403
    %v498 = vpack.c.b16 %v406, %v405
    %v499 = vpack.c.b16 %v408, %v407
    %v500 = vpack.c.b16 %v410, %v409
    %v501 = vpack.c.b16 %v412, %v411
    %v502 = vpack.c.b16 %v414, %v413
    %v503 = vpack.c.b16 %v416, %v415
    %v504 = vpack.c.b16 %v418, %v417
    %v505 = vpack.c.b16 %v420, %v419
    %v506 = vpack.c.b16 %v422, %v421
    %v507 = vpack.c.b16 %v424, %v423
    %v508 = vpack.c.b16 %v426, %v425
    %v509 = vpack.c.b16 %v428, %v427
    %v510 = vpack.c.b16 %v430, %v429
    %v511 = vpack.c.b16 %v432, %v431
    %v512 = vpack.c.b16 %v434, %v433
    %v513 = vpack.c.b16 %v436, %v435
    %v514 = vpack.c.b16 %v438, %v437
    %v515 = vpack.c.b16 %v440, %v439
    %v516 = vpack.c.b16 %v442, %v441
    %v517 = vpack.c.b16 %v444, %v443
    %v518 = vpack.c.b16 %v446, %v445
    %v519 = vpack.c.b16 %v448, %v447
    %v520 = vpack.c.b16 %v450, %v449
    %v521 = vpack.c.b16 %v452, %v451
    %v522 = vpack.c.b16 %v454, %v453
    %v523 = vpack.c.b16 %v456, %v455
    %v524 = vpack.c.b16 %v458, %v457
    %v525 = vpack.c.b16 %v460, %v459
    %v526 = vpack.c.b16 %v462, %v461
    %591 = vmatprep.subr.bf16.mxu0 0
    %592 = vmatpush1.bf16.msra.mxu0 %v463
    %593 = vmatprep.subr.bf16.mxu0 0
    %594 = vmatpush1.bf16.msra.mxu0 %v464
    %595 = vmatprep.subr.bf16.mxu0 0
    %596 = vmatpush1.bf16.msra.mxu0 %v465
    %597 = vmatprep.subr.bf16.mxu0 0
    %598 = vmatpush1.bf16.msra.mxu0 %v466
    %599 = vmatprep.subr.bf16.mxu0 0
    %600 = vmatpush1.bf16.msra.mxu0 %v467
    %601 = vmatprep.subr.bf16.mxu0 0
    %602 = vmatpush1.bf16.msra.mxu0 %v468
    %603 = vmatprep.subr.bf16.mxu0 0
    %604 = vmatpush1.bf16.msra.mxu0 %v469
    %605 = vmatprep.subr.bf16.mxu0 0
    %606 = vmatpush1.bf16.msra.mxu0 %v470
    %607 = vmatprep.subr.bf16.mxu0 0
    %608 = vmatpush1.bf16.msra.mxu0 %v471
    %609 = vmatprep.subr.bf16.mxu0 0
    %610 = vmatpush1.bf16.msra.mxu0 %v472
    %611 = vmatprep.subr.bf16.mxu0 0
    %612 = vmatpush1.bf16.msra.mxu0 %v473
    %613 = vmatprep.subr.bf16.mxu0 0
    %614 = vmatpush1.bf16.msra.mxu0 %v474
    %615 = vmatprep.subr.bf16.mxu0 0
    %616 = vmatpush1.bf16.msra.mxu0 %v475
    %617 = vmatprep.subr.bf16.mxu0 0
    %618 = vmatpush1.bf16.msra.mxu0 %v476
    %619 = vmatprep.subr.bf16.mxu0 0
    %620 = vmatpush1.bf16.msra.mxu0 %v477
    %621 = vmatprep.subr.bf16.mxu0 0
    %622 = vmatpush1.bf16.msra.mxu0 %v478
    %623 = vmatprep.mubr.bf16.mxu0 %v192
    %624 = vmatmul.mubr.bf16.gmra.mrb[0].mxu0 %v191
    %v625 = vpop.f32.mrb[0].mxu0
    %v626 = vadd.f32 %v177, %v625
    %v627 = vpop.f32.mrb[0].mxu0
    %v628 = vpop.f32.mrb[0].mxu0
    %v629 = vpop.f32.mrb[0].mxu0
    %630 = vdwg.mxu0
    %631 = vmatprep.subr.bf16.mxu0 0
    %632 = vmatpush1.bf16.msra.mxu0 %v479
    %633 = vmatprep.subr.bf16.mxu0 0
    %634 = vmatpush1.bf16.msra.mxu0 %v480
    %635 = vmatprep.subr.bf16.mxu0 0
    %636 = vmatpush1.bf16.msra.mxu0 %v481
    %637 = vmatprep.subr.bf16.mxu0 0
    %638 = vmatpush1.bf16.msra.mxu0 %v482
    %639 = vmatprep.subr.bf16.mxu0 0
    %640 = vmatpush1.bf16.msra.mxu0 %v483
    %641 = vmatprep.subr.bf16.mxu0 0
    %642 = vmatpush1.bf16.msra.mxu0 %v484
    %643 = vmatprep.subr.bf16.mxu0 0
    %644 = vmatpush1.bf16.msra.mxu0 %v485
    %645 = vmatprep.subr.bf16.mxu0 0
    %646 = vmatpush1.bf16.msra.mxu0 %v486
    %647 = vmatprep.subr.bf16.mxu0 0
    %648 = vmatpush1.bf16.msra.mxu0 %v487
    %649 = vmatprep.subr.bf16.mxu0 0
    %650 = vmatpush1.bf16.msra.mxu0 %v488
    %651 = vmatprep.subr.bf16.mxu0 0
    %652 = vmatpush1.bf16.msra.mxu0 %v489
    %653 = vmatprep.subr.bf16.mxu0 0
    %654 = vmatpush1.bf16.msra.mxu0 %v490
    %655 = vmatprep.subr.bf16.mxu0 0
    %656 = vmatpush1.bf16.msra.mxu0 %v491
    %657 = vmatprep.subr.bf16.mxu0 0
    %658 = vmatpush1.bf16.msra.mxu0 %v492
    %659 = vmatprep.subr.bf16.mxu0 0
    %660 = vmatpush1.bf16.msra.mxu0 %v493
    %661 = vmatprep.subr.bf16.mxu0 0
    %662 = vmatpush1.bf16.msra.mxu0 %v494
    %663 = vmatprep.mubr.bf16.mxu0 %v194
    %664 = vmatmul.mubr.bf16.gmra.mrb[0].mxu0 %v193
    %v665 = vpop.f32.mrb[0].mxu0
    %v666 = vadd.f32 %v626, %v665
    %v667 = vpop.f32.mrb[0].mxu0
    %v668 = vpop.f32.mrb[0].mxu0
    %v669 = vpop.f32.mrb[0].mxu0
    %670 = vdwg.mxu0
    %671 = vmatprep.subr.bf16.mxu0 0
    %672 = vmatpush1.bf16.msra.mxu0 %v495
    %673 = vmatprep.subr.bf16.mxu0 0
    %674 = vmatpush1.bf16.msra.mxu0 %v496
    %675 = vmatprep.subr.bf16.mxu0 0
    %676 = vmatpush1.bf16.msra.mxu0 %v497
    %677 = vmatprep.subr.bf16.mxu0 0
    %678 = vmatpush1.bf16.msra.mxu0 %v498
    %679 = vmatprep.subr.bf16.mxu0 0
    %680 = vmatpush1.bf16.msra.mxu0 %v499
    %681 = vmatprep.subr.bf16.mxu0 0
    %682 = vmatpush1.bf16.msra.mxu0 %v500
    %683 = vmatprep.subr.bf16.mxu0 0
    %684 = vmatpush1.bf16.msra.mxu0 %v501
    %685 = vmatprep.subr.bf16.mxu0 0
    %686 = vmatpush1.bf16.msra.mxu0 %v502
    %687 = vmatprep.subr.bf16.mxu0 0
    %688 = vmatpush1.bf16.msra.mxu0 %v503
    %689 = vmatprep.subr.bf16.mxu0 0
    %690 = vmatpush1.bf16.msra.mxu0 %v504
    %691 = vmatprep.subr.bf16.mxu0 0
    %692 = vmatpush1.bf16.msra.mxu0 %v505
    %693 = vmatprep.subr.bf16.mxu0 0
    %694 = vmatpush1.bf16.msra.mxu0 %v506
    %695 = vmatprep.subr.bf16.mxu0 0
    %696 = vmatpush1.bf16.msra.mxu0 %v507
    %697 = vmatprep.subr.bf16.mxu0 0
    %698 = vmatpush1.bf16.msra.mxu0 %v508
    %699 = vmatprep.subr.bf16.mxu0 0
    %700 = vmatpush1.bf16.msra.mxu0 %v509
    %701 = vmatprep.subr.bf16.mxu0 0
    %702 = vmatpush1.bf16.msra.mxu0 %v510
    %703 = vmatprep.mubr.bf16.mxu0 %v196
    %704 = vmatmul.mubr.bf16.gmra.mrb[0].mxu0 %v195
    %v705 = vpop.f32.mrb[0].mxu0
    %v706 = vadd.f32 %v666, %v705
    %v707 = vpop.f32.mrb[0].mxu0
    %v708 = vpop.f32.mrb[0].mxu0
    %v709 = vpop.f32.mrb[0].mxu0
    %710 = vdwg.mxu0
    %711 = vmatprep.subr.bf16.mxu0 0
    %712 = vmatpush1.bf16.msra.mxu0 %v511
    %713 = vmatprep.subr.bf16.mxu0 0
    %714 = vmatpush1.bf16.msra.mxu0 %v512
    %715 = vmatprep.subr.bf16.mxu0 0
    %716 = vmatpush1.bf16.msra.mxu0 %v513
    %717 = vmatprep.subr.bf16.mxu0 0
    %718 = vmatpush1.bf16.msra.mxu0 %v514
    %719 = vmatprep.subr.bf16.mxu0 0
    %720 = vmatpush1.bf16.msra.mxu0 %v515
    %721 = vmatprep.subr.bf16.mxu0 0
    %722 = vmatpush1.bf16.msra.mxu0 %v516
    %723 = vmatprep.subr.bf16.mxu0 0
    %724 = vmatpush1.bf16.msra.mxu0 %v517
    %725 = vmatprep.subr.bf16.mxu0 0
    %726 = vmatpush1.bf16.msra.mxu0 %v518
    %727 = vmatprep.subr.bf16.mxu0 0
    %728 = vmatpush1.bf16.msra.mxu0 %v519
    %729 = vmatprep.subr.bf16.mxu0 0
    %730 = vmatpush1.bf16.msra.mxu0 %v520
    %731 = vmatprep.subr.bf16.mxu0 0
    %732 = vmatpush1.bf16.msra.mxu0 %v521
    %733 = vmatprep.subr.bf16.mxu0 0
    %734 = vmatpush1.bf16.msra.mxu0 %v522
    %735 = vmatprep.subr.bf16.mxu0 0
    %736 = vmatpush1.bf16.msra.mxu0 %v523
    %737 = vmatprep.subr.bf16.mxu0 0
    %738 = vmatpush1.bf16.msra.mxu0 %v524
    %739 = vmatprep.subr.bf16.mxu0 0
    %740 = vmatpush1.bf16.msra.mxu0 %v525
    %741 = vmatprep.subr.bf16.mxu0 0
    %742 = vmatpush1.bf16.msra.mxu0 %v526
    %743 = vmatprep.mubr.bf16.mxu0 %v198
    %744 = vmatmul.mubr.bf16.gmra.mrb[0].mxu0 %v197
    %v745 = vpop.f32.mrb[0].mxu0
    %v746 = vadd.f32 %v706, %v745
    %v747 = vpop.f32.mrb[0].mxu0
    %v748 = vpop.f32.mrb[0].mxu0
    %v749 = vpop.f32.mrb[0].mxu0
    %750 = vdwg.mxu0
    %v751 = vmax.f32 %v746, 0.0
    %v752 = vld [vmem:[%s3] sm:$0xff]
    %v753 = vld [vmem:[%s3 + $0x8] sm:$0xff]
    %v754 = vld [vmem:[%s3 + $0x10] sm:$0xff]
    %v755 = vld [vmem:[%s3 + $0x18] sm:$0xff]
    %v756 = vld [vmem:[%s4] sm:$0x1]
    %v758 = vlaneseq
    %v759 = vshrl.u32 %v758, 7
    %v760 = vsub.s32 0, %v759
    %v761 = vrot.slane %v756, %v760
    %vm763 = vcmask 261120
    %v765 = vsel %vm763, %v751, 0
    %767 = vmatprep.subr.mxu0 0.0
    %768 = vmatpush1.msra.mxu0 %v752
    %769 = vmatprep.subr.mxu0 0.0
    %770 = vmatpush1.msra.mxu0 %v753
    %771 = vmatprep.subr.mxu0 0.0
    %772 = vmatpush1.msra.mxu0 %v754
    %773 = vmatprep.subr.mxu0 0.0
    %774 = vmatpush1.msra.mxu0 %v755
    %775 = vmatprep.subr.mxu0 0.0
    %776 = vmatpush1.msra.mxu0 0.0
    %777 = vmatprep.subr.mxu0 0.0
    %778 = vmatpush1.msra.mxu0 0.0
    %779 = vmatprep.subr.mxu0 0.0
    %780 = vmatpush1.msra.mxu0 0.0
    %781 = vmatprep.subr.mxu0 0.0
    %782 = vmatpush1.msra.mxu0 0.0
    %783 = vmatprep.subr.mxu0 0.0
    %784 = vmatpush1.msra.mxu0 0.0
    %785 = vmatprep.subr.mxu0 0.0
    %786 = vmatpush1.msra.mxu0 0.0
    %787 = vmatprep.subr.mxu0 0.0
    %788 = vmatpush1.msra.mxu0 0.0
    %789 = vmatprep.subr.mxu0 0.0
    %790 = vmatpush1.msra.mxu0 0.0
    %791 = vmatprep.subr.mxu0 0.0
    %792 = vmatpush1.msra.mxu0 0.0
    %793 = vmatprep.subr.mxu0 0.0
    %794 = vmatpush1.msra.mxu0 0.0
    %795 = vmatprep.subr.mxu0 0.0
    %796 = vmatpush1.msra.mxu0 0.0
    %797 = vmatprep.subr.mxu0 0.0
    %798 = vmatpush1.msra.mxu0 0.0
    %799 = vmatprep.subr.mxu0 0.0
    %800 = vmatpush1.msra.mxu0 0.0
    %801 = vmatprep.subr.mxu0 0.0
    %802 = vmatpush1.msra.mxu0 0.0
    %803 = vmatprep.subr.mxu0 0.0
    %804 = vmatpush1.msra.mxu0 0.0
    %805 = vmatprep.subr.mxu0 0.0
    %806 = vmatpush1.msra.mxu0 0.0
    %807 = vmatprep.subr.mxu0 0.0
    %808 = vmatpush1.msra.mxu0 0.0
    %809 = vmatprep.subr.mxu0 0.0
    %810 = vmatpush1.msra.mxu0 0.0
    %811 = vmatprep.subr.mxu0 0.0
    %812 = vmatpush1.msra.mxu0 0.0
    %813 = vmatprep.subr.mxu0 0.0
    %814 = vmatpush1.msra.mxu0 0.0
    %815 = vmatprep.subr.mxu0 0.0
    %816 = vmatpush1.msra.mxu0 0.0
    %817 = vmatprep.subr.mxu0 0.0
    %818 = vmatpush1.msra.mxu0 0.0
    %819 = vmatprep.subr.mxu0 0.0
    %820 = vmatpush1.msra.mxu0 0.0
    %821 = vmatprep.subr.mxu0 0.0
    %822 = vmatpush1.msra.mxu0 0.0
    %823 = vmatprep.subr.mxu0 0.0
    %824 = vmatpush1.msra.mxu0 0.0
    %825 = vmatprep.subr.mxu0 0.0
    %826 = vmatpush1.msra.mxu0 0.0
    %827 = vmatprep.subr.mxu0 0.0
    %828 = vmatpush1.msra.mxu0 0.0
    %829 = vmatprep.subr.mxu0 0.0
    %830 = vmatpush1.msra.mxu0 0.0
    %831 = vmatprep.mubr.f32.mxu0 0.0
    %832 = vmatmul.mubr.f32.gmra.mrb[0].mxu0 %v765
    %v833 = vpop.f32.mrb[0].mxu0
    %v834 = vadd.f32 %v761, %v833
    %v835 = vpop.f32.mrb[0].mxu0
    %836 = vdwg.mxu0
    %v837 = vmax.f32 %v834, 0.0
    %v838 = vld [vmem:[%s5] sm:$0xff]
    %v839 = vld [vmem:[%s5 + $0x8] sm:$0xff]
    %v840 = vld [vmem:[%s5 + $0x10] sm:$0xff]
    %v841 = vld [vmem:[%s5 + $0x18] sm:$0xff]
    %v842 = vld [vmem:[%s6] sm:$0x1]
    %v844 = vlaneseq
    %v845 = vshrl.u32 %v844, 7
    %v846 = vsub.s32 0, %v845
    %v847 = vrot.slane %v842, %v846
    %v850 = vsel %vm763, %v837, 0
    %852 = vmatprep.subr.mxu0 0.0
    %853 = vmatpush1.msra.mxu0 %v838
    %854 = vmatprep.subr.mxu0 0.0
    %855 = vmatpush1.msra.mxu0 %v839
    %856 = vmatprep.subr.mxu0 0.0
    %857 = vmatpush1.msra.mxu0 %v840
    %858 = vmatprep.subr.mxu0 0.0
    %859 = vmatpush1.msra.mxu0 %v841
    %860 = vmatprep.subr.mxu0 0.0
    %861 = vmatpush1.msra.mxu0 0.0
    %862 = vmatprep.subr.mxu0 0.0
    %863 = vmatpush1.msra.mxu0 0.0
    %864 = vmatprep.subr.mxu0 0.0
    %865 = vmatpush1.msra.mxu0 0.0
    %866 = vmatprep.subr.mxu0 0.0
    %867 = vmatpush1.msra.mxu0 0.0
    %868 = vmatprep.subr.mxu0 0.0
    %869 = vmatpush1.msra.mxu0 0.0
    %870 = vmatprep.subr.mxu0 0.0
    %871 = vmatpush1.msra.mxu0 0.0
    %872 = vmatprep.subr.mxu0 0.0
    %873 = vmatpush1.msra.mxu0 0.0
    %874 = vmatprep.subr.mxu0 0.0
    %875 = vmatpush1.msra.mxu0 0.0
    %876 = vmatprep.subr.mxu0 0.0
    %877 = vmatpush1.msra.mxu0 0.0
    %878 = vmatprep.subr.mxu0 0.0
    %879 = vmatpush1.msra.mxu0 0.0
    %880 = vmatprep.subr.mxu0 0.0
    %881 = vmatpush1.msra.mxu0 0.0
    %882 = vmatprep.subr.mxu0 0.0
    %883 = vmatpush1.msra.mxu0 0.0
    %884 = vmatprep.subr.mxu0 0.0
    %885 = vmatpush1.msra.mxu0 0.0
    %886 = vmatprep.subr.mxu0 0.0
    %887 = vmatpush1.msra.mxu0 0.0
    %888 = vmatprep.subr.mxu0 0.0
    %889 = vmatpush1.msra.mxu0 0.0
    %890 = vmatprep.subr.mxu0 0.0
    %891 = vmatpush1.msra.mxu0 0.0
    %892 = vmatprep.subr.mxu0 0.0
    %893 = vmatpush1.msra.mxu0 0.0
    %894 = vmatprep.subr.mxu0 0.0
    %895 = vmatpush1.msra.mxu0 0.0
    %896 = vmatprep.subr.mxu0 0.0
    %897 = vmatpush1.msra.mxu0 0.0
    %898 = vmatprep.subr.mxu0 0.0
    %899 = vmatpush1.msra.mxu0 0.0
    %900 = vmatprep.subr.mxu0 0.0
    %901 = vmatpush1.msra.mxu0 0.0
    %902 = vmatprep.subr.mxu0 0.0
    %903 = vmatpush1.msra.mxu0 0.0
    %904 = vmatprep.subr.mxu0 0.0
    %905 = vmatpush1.msra.mxu0 0.0
    %906 = vmatprep.subr.mxu0 0.0
    %907 = vmatpush1.msra.mxu0 0.0
    %908 = vmatprep.subr.mxu0 0.0
    %909 = vmatpush1.msra.mxu0 0.0
    %910 = vmatprep.subr.mxu0 0.0
    %911 = vmatpush1.msra.mxu0 0.0
    %912 = vmatprep.subr.mxu0 0.0
    %913 = vmatpush1.msra.mxu0 0.0
    %914 = vmatprep.subr.mxu0 0.0
    %915 = vmatpush1.msra.mxu0 0.0
    %916 = vmatprep.mubr.f32.mxu0 0.0
    %917 = vmatmul.mubr.f32.gmra.mrb[0].mxu0 %v850
    %v918 = vpop.f32.mrb[0].mxu0
    %v919 = vadd.f32 %v847, %v918
    %v920 = vpop.f32.mrb[0].mxu0
    %921 = vdwg.mxu0
    %v922 = vmax.f32 %v919, 0.0
    %v923 = vld [vmem:[%s7] sm:$0xff]
    %v924 = vld [vmem:[%s7 + $0x8] sm:$0xff]
    %v925 = vld [vmem:[%s7 + $0x10] sm:$0xff]
    %v926 = vld [vmem:[%s7 + $0x18] sm:$0xff]
    %v927 = vld [vmem:[%s8] sm:$0x1]
    %v929 = vlaneseq
    %v930 = vshrl.u32 %v929, 7
    %v931 = vsub.s32 0, %v930
    %v932 = vrot.slane %v927, %v931
    %v935 = vsel %vm763, %v922, 0
    %937 = vmatprep.subr.mxu0 0.0
    %938 = vmatpush1.msra.mxu0 %v923
    %939 = vmatprep.subr.mxu0 0.0
    %940 = vmatpush1.msra.mxu0 %v924
    %941 = vmatprep.subr.mxu0 0.0
    %942 = vmatpush1.msra.mxu0 %v925
    %943 = vmatprep.subr.mxu0 0.0
    %944 = vmatpush1.msra.mxu0 %v926
    %945 = vmatprep.subr.mxu0 0.0
    %946 = vmatpush1.msra.mxu0 0.0
    %947 = vmatprep.subr.mxu0 0.0
    %948 = vmatpush1.msra.mxu0 0.0
    %949 = vmatprep.subr.mxu0 0.0
    %950 = vmatpush1.msra.mxu0 0.0
    %951 = vmatprep.subr.mxu0 0.0
    %952 = vmatpush1.msra.mxu0 0.0
    %953 = vmatprep.subr.mxu0 0.0
    %954 = vmatpush1.msra.mxu0 0.0
    %955 = vmatprep.subr.mxu0 0.0
    %956 = vmatpush1.msra.mxu0 0.0
    %957 = vmatprep.subr.mxu0 0.0
    %958 = vmatpush1.msra.mxu0 0.0
    %959 = vmatprep.subr.mxu0 0.0
    %960 = vmatpush1.msra.mxu0 0.0
    %961 = vmatprep.subr.mxu0 0.0
    %962 = vmatpush1.msra.mxu0 0.0
    %963 = vmatprep.subr.mxu0 0.0
    %964 = vmatpush1.msra.mxu0 0.0
    %965 = vmatprep.subr.mxu0 0.0
    %966 = vmatpush1.msra.mxu0 0.0
    %967 = vmatprep.subr.mxu0 0.0
    %968 = vmatpush1.msra.mxu0 0.0
    %969 = vmatprep.subr.mxu0 0.0
    %970 = vmatpush1.msra.mxu0 0.0
    %971 = vmatprep.subr.mxu0 0.0
    %972 = vmatpush1.msra.mxu0 0.0
    %973 = vmatprep.subr.mxu0 0.0
    %974 = vmatpush1.msra.mxu0 0.0
    %975 = vmatprep.subr.mxu0 0.0
    %976 = vmatpush1.msra.mxu0 0.0
    %977 = vmatprep.subr.mxu0 0.0
    %978 = vmatpush1.msra.mxu0 0.0
    %979 = vmatprep.subr.mxu0 0.0
    %980 = vmatpush1.msra.mxu0 0.0
    %981 = vmatprep.subr.mxu0 0.0
    %982 = vmatpush1.msra.mxu0 0.0
    %983 = vmatprep.subr.mxu0 0.0
    %984 = vmatpush1.msra.mxu0 0.0
    %985 = vmatprep.subr.mxu0 0.0
    %986 = vmatpush1.msra.mxu0 0.0
    %987 = vmatprep.subr.mxu0 0.0
    %988 = vmatpush1.msra.mxu0 0.0
    %989 = vmatprep.subr.mxu0 0.0
    %990 = vmatpush1.msra.mxu0 0.0
    %991 = vmatprep.subr.mxu0 0.0
    %992 = vmatpush1.msra.mxu0 0.0
    %993 = vmatprep.subr.mxu0 0.0
    %994 = vmatpush1.msra.mxu0 0.0
    %995 = vmatprep.subr.mxu0 0.0
    %996 = vmatpush1.msra.mxu0 0.0
    %997 = vmatprep.subr.mxu0 0.0
    %998 = vmatpush1.msra.mxu0 0.0
    %999 = vmatprep.subr.mxu0 0.0
    %1000 = vmatpush1.msra.mxu0 0.0
    %1001 = vmatprep.mubr.f32.mxu0 0.0
    %1002 = vmatmul.mubr.f32.gmra.mrb[0].mxu0 %v935
    %v1003 = vpop.f32.mrb[0].mxu0
    %v1004 = vadd.f32 %v932, %v1003
    %v1005 = vpop.f32.mrb[0].mxu0
    %1006 = vdwg.mxu0
    %v1007 = vmax.f32 %v1004, 0.0
    %v1008 = vld [vmem:[%s9] sm:$0xff]
    %v1009 = vld [vmem:[%s9 + $0x8] sm:$0xff]
    %v1010 = vld [vmem:[%s9 + $0x10] sm:$0xff]
    %v1011 = vld [vmem:[%s9 + $0x18] sm:$0xff]
    %v1012 = vld [vmem:[%s10] sm:$0x1]
    %v1014 = vlaneseq
    %v1015 = vshrl.u32 %v1014, 7
    %v1016 = vsub.s32 0, %v1015
    %v1017 = vrot.slane %v1012, %v1016
    %v1020 = vsel %vm763, %v1007, 0
    %1022 = vmatprep.subr.mxu0 0.0
    %1023 = vmatpush1.msra.mxu0 %v1008
    %1024 = vmatprep.subr.mxu0 0.0
    %1025 = vmatpush1.msra.mxu0 %v1009
    %1026 = vmatprep.subr.mxu0 0.0
    %1027 = vmatpush1.msra.mxu0 %v1010
    %1028 = vmatprep.subr.mxu0 0.0
    %1029 = vmatpush1.msra.mxu0 %v1011
    %1030 = vmatprep.subr.mxu0 0.0
    %1031 = vmatpush1.msra.mxu0 0.0
    %1032 = vmatprep.subr.mxu0 0.0
    %1033 = vmatpush1.msra.mxu0 0.0
    %1034 = vmatprep.subr.mxu0 0.0
    %1035 = vmatpush1.msra.mxu0 0.0
    %1036 = vmatprep.subr.mxu0 0.0
    %1037 = vmatpush1.msra.mxu0 0.0
    %1038 = vmatprep.subr.mxu0 0.0
    %1039 = vmatpush1.msra.mxu0 0.0
    %1040 = vmatprep.subr.mxu0 0.0
    %1041 = vmatpush1.msra.mxu0 0.0
    %1042 = vmatprep.subr.mxu0 0.0
    %1043 = vmatpush1.msra.mxu0 0.0
    %1044 = vmatprep.subr.mxu0 0.0
    %1045 = vmatpush1.msra.mxu0 0.0
    %1046 = vmatprep.subr.mxu0 0.0
    %1047 = vmatpush1.msra.mxu0 0.0
    %1048 = vmatprep.subr.mxu0 0.0
    %1049 = vmatpush1.msra.mxu0 0.0
    %1050 = vmatprep.subr.mxu0 0.0
    %1051 = vmatpush1.msra.mxu0 0.0
    %1052 = vmatprep.subr.mxu0 0.0
    %1053 = vmatpush1.msra.mxu0 0.0
    %1054 = vmatprep.subr.mxu0 0.0
    %1055 = vmatpush1.msra.mxu0 0.0
    %1056 = vmatprep.subr.mxu0 0.0
    %1057 = vmatpush1.msra.mxu0 0.0
    %1058 = vmatprep.subr.mxu0 0.0
    %1059 = vmatpush1.msra.mxu0 0.0
    %1060 = vmatprep.subr.mxu0 0.0
    %1061 = vmatpush1.msra.mxu0 0.0
    %1062 = vmatprep.subr.mxu0 0.0
    %1063 = vmatpush1.msra.mxu0 0.0
    %1064 = vmatprep.subr.mxu0 0.0
    %1065 = vmatpush1.msra.mxu0 0.0
    %1066 = vmatprep.subr.mxu0 0.0
    %1067 = vmatpush1.msra.mxu0 0.0
    %1068 = vmatprep.subr.mxu0 0.0
    %1069 = vmatpush1.msra.mxu0 0.0
    %1070 = vmatprep.subr.mxu0 0.0
    %1071 = vmatpush1.msra.mxu0 0.0
    %1072 = vmatprep.subr.mxu0 0.0
    %1073 = vmatpush1.msra.mxu0 0.0
    %1074 = vmatprep.subr.mxu0 0.0
    %1075 = vmatpush1.msra.mxu0 0.0
    %1076 = vmatprep.subr.mxu0 0.0
    %1077 = vmatpush1.msra.mxu0 0.0
    %1078 = vmatprep.subr.mxu0 0.0
    %1079 = vmatpush1.msra.mxu0 0.0
    %1080 = vmatprep.subr.mxu0 0.0
    %1081 = vmatpush1.msra.mxu0 0.0
    %1082 = vmatprep.subr.mxu0 0.0
    %1083 = vmatpush1.msra.mxu0 0.0
    %1084 = vmatprep.subr.mxu0 0.0
    %1085 = vmatpush1.msra.mxu0 0.0
    %1086 = vmatprep.mubr.f32.mxu0 0.0
    %1087 = vmatmul.mubr.f32.gmra.mrb[0].mxu0 %v1020
    %v1088 = vpop.f32.mrb[0].mxu0
    %v1089 = vadd.f32 %v1017, %v1088
    %v1090 = vpop.f32.mrb[0].mxu0
    %1091 = vdwg.mxu0
    %1092 = vst [vmem:[#allocation2] sm:$0xff] %v1089
    // Predicated region
    $region46: #{tpu_custom_call.1} parent=1 // pred_check
      _
    $region47: #{tpu_custom_call.1} parent=1 // pred_check_branch
      %1094 = sbr.rel (0) target = $region49
    $region48: #{tpu_custom_call.1} parent=1 // pred_region
      %s1096 = ssub.s32 128, 128
      %1097 = vsyncadd [#allocation3], %s1096
      %s1099 = sshll.u32 [#allocation2], 4
      %s1100 = int_to_ptr.vmem [resolvable:$true] %s1099
      %1102 = dma.vmem_to_hbm [thread:$0]  %s1100, 128, %s11, [#allocation3]
    $region49: #{tpu_custom_call.1} parent=1 // pred_fallthru
      _
    // Predicated region
    $region50: #{tpu_custom_call.1} parent=1 // pred_check
      _
    $region51: #{tpu_custom_call.1} parent=1 // pred_check_branch
      %1104 = sbr.rel (0) target = $region53
    $region52: #{tpu_custom_call.1} parent=1 // pred_region
      %1105 = dma.done [#allocation3], 128
    $region53: #{tpu_custom_call.1} parent=1 // pred_fallthru
      _
    %1106 = vsyncpa [#allocation3], 1

</llo_original>
